<compile_context>
chip_gen: v6e
topology: v6e:2x2x1
jax: 0.10.0
libtpu: 0.0.40
codegen_flags: <defaults>
</compile_context>

<pallas_src>
import jax
import jax.numpy as jnp
from jax.experimental import pallas as pl
from jax.experimental.pallas import tpu as pltpu

_LANE = 128
_SUBLANE = 8


def _round_up(x, m):
    return (x + m - 1) // m * m


def _cdiv(a, b):
    return (a + b - 1) // b


# ----------------------------------------------------------------------------
# Kernels
# ----------------------------------------------------------------------------
def _classify_onepass_kernel(feat_ref, w_ref, b_ref, o_ref):
    # feat: (tn, K) activation dtype (f32); w: (K, Cpad) compute dtype
    # (canonical, pre-transposed at pack time); b: (1, Cpad) f32.
    f = feat_ref[...].astype(w_ref.dtype)          # VPU cast, hidden under DMA/MXU
    acc = jnp.dot(f, w_ref[...], preferred_element_type=jnp.float32)
    o_ref[...] = (acc + b_ref[...]).astype(o_ref.dtype)


def _classify_kred_kernel(feat_ref, w_ref, b_ref, o_ref, acc_ref):
    # Fallback for very large K: grid = (N tiles, K tiles), K trailing.
    k = pl.program_id(1)

    @pl.when(k == 0)
    def _init():
        # Fold the bias into the accumulator at k == 0 (no epilogue add).
        acc_ref[...] = jnp.broadcast_to(b_ref[...], acc_ref.shape)

    f = feat_ref[...].astype(w_ref.dtype)
    acc_ref[...] += jnp.dot(f, w_ref[...], preferred_element_type=jnp.float32)

    @pl.when(k == pl.num_programs(1) - 1)
    def _finalize():
        o_ref[...] = acc_ref[...].astype(o_ref.dtype)


# ----------------------------------------------------------------------------
# Parameter packing (hoisted: call once per weight, never per forward)
# ----------------------------------------------------------------------------
def pack_linear_params(w, b, compute_dtype=jnp.bfloat16):
    """w: (nb_classes, fc_in_dim) torch layout; b: (nb_classes,).

    Returns:
      w_pack: (fc_in_dim, Cpad) compute dtype -- pre-transposed to the
              canonical MXU layout, classes zero-padded to a multiple of 128.
      b_pack: (1, Cpad) float32.
    """
    nb_classes, k_dim = w.shape
    cpad = _round_up(nb_classes, _LANE)
    w_pack = jnp.zeros((k_dim, cpad), compute_dtype).at[:, :nb_classes].set(
        jnp.transpose(w).astype(compute_dtype))
    b_pack = jnp.zeros((1, cpad), jnp.float32).at[0, :nb_classes].set(
        b.astype(jnp.float32))
    return w_pack, b_pack


# ----------------------------------------------------------------------------
# Tiling / VMEM budgeting
# ----------------------------------------------------------------------------
def _vmem_budget():
    """Returns (budget_bytes, physical_bytes) for this generation."""
    phys = 64 * 2 ** 20                       # assume smallest (v7x) if unknown
    try:
        phys = int(pltpu.get_tpu_info().vmem_capacity_bytes)
    except Exception:
        pass
    if phys <= 64 * 2 ** 20:                  # v7x: 64 MiB per TensorCore
        return 40 * 2 ** 20, phys
    return 96 * 2 ** 20, phys                 # v5e / v6e: 128 MiB


def _estimate_vmem(tn, tk, cpad, kred, act_itemsize):
    # Conservative: operands counted double-buffered even where single
    # buffering is requested, so the no-Buffered fallback still fits.
    est = (2 * tn * tk * act_itemsize         # activation tile (streams)
           + 2 * tk * cpad * 2                # bf16 weight tile
           + 2 * tn * cpad * 4                # output tile
           + 2 * _SUBLANE * cpad * 4)         # bias (sublane-padded)
    if kred:
        est += tn * cpad * 4                  # f32 accumulator scratch
    return est


def _select_tiles(n, k_dim, cpad, act_itemsize, budget):
    usable = (budget * 3) // 4                # headroom for Mosaic internal scratch
    tn_max = 512 if budget > 64 * 2 ** 20 else 256

    if n <= 16:
        tn = n                                # tiny batch: launch-overhead regime
    else:
        # >= ~4 steps on the parallel batch axis: enables DMA/compute overlap
        # and megacore sharding on v7x.  Sublane-aligned.
        tn = min(tn_max, max(_SUBLANE, _round_up(_cdiv(n, 4), _SUBLANE)))

    # Prefer a single pass over K (whole weight resident in VMEM).
    while (tn > _SUBLANE and n > 16
           and _estimate_vmem(tn, k_dim, cpad, False, act_itemsize) > usable):
        tn = max(_SUBLANE, _round_up(tn // 2, _SUBLANE))
    if _estimate_vmem(tn, k_dim, cpad, False, act_itemsize) <= usable:
        return tn, k_dim, False

    # K-reduction fallback: tk must divide K and be a multiple of 128
    # (zero-risk vs. padded-K garbage polluting the contraction).
    for cand in (8192, 4096, 2048, 1024, 512, 256, 128):
        if k_dim % cand == 0 and _estimate_vmem(tn, cand, cpad, True,
                                                act_itemsize) <= usable:
            return tn, cand, True

    # Last resort (awkward K): keep K resident, accept the larger footprint.
    return tn, k_dim, False


# ----------------------------------------------------------------------------
# Forward
# ----------------------------------------------------------------------------
def classify_forward(x, w_pack, b_pack, nb_classes, *, return_feature=False):
    """x: (N, C, H, W).  w_pack/b_pack from pack_linear_params (hoisted)."""
    n = x.shape[0]
    feature = x.reshape(n, -1)                # NCHW flatten (metadata-only)
    k_dim, cpad = w_pack.shape
    assert feature.shape[1] == k_dim, "fc_in_dim mismatch between x and W"

    act_itemsize = jnp.dtype(feature.dtype).itemsize
    budget, phys = _vmem_budget()
    tn, tk, kred = _select_tiles(n, k_dim, cpad, act_itemsize, budget)
    need = _estimate_vmem(tn, tk, cpad, kred, act_itemsize)
    vmem_limit = int(min(max(budget, need + (4 << 20)), phys - (8 << 20)))

    n_tiles = _cdiv(n, tn)                    # partial last tile handled by Pallas

    def _run(single_buffer_resident):
        def resident(shape, imap):
            # Grid-invariant operand: request single buffering to save VMEM.
            if single_buffer_resident:
                return pl.BlockSpec(shape, imap, pipeline_mode=pl.Buffered(1))
            return pl.BlockSpec(shape, imap)

        if not kred:
            grid = (n_tiles,)
            kernel = _classify_onepass_kernel
            in_specs = [
                pl.BlockSpec((tn, k_dim), lambda i: (i, 0)),   # activations (stream)
                resident((k_dim, cpad), lambda i: (0, 0)),     # W, resident
                resident((1, cpad), lambda i: (0, 0)),         # bias, resident
            ]
            out_specs = pl.BlockSpec((tn, cpad), lambda i: (i, 0))
            scratch = []
            dims = ("parallel",)
        else:
            grid = (n_tiles, k_dim // tk)
            kernel = _classify_kred_kernel
            in_specs = [
                pl.BlockSpec((tn, tk), lambda i, k: (i, k)),
                pl.BlockSpec((tk, cpad), lambda i, k: (k, 0)),
                resident((1, cpad), lambda i, k: (0, 0)),
            ]
            out_specs = pl.BlockSpec((tn, cpad), lambda i, k: (i, 0))
            scratch = [pltpu.VMEM((tn, cpad), jnp.float32)]
            dims = ("parallel", "arbitrary")

        return pl.pallas_call(
            kernel,
            out_shape=jax.ShapeDtypeStruct((n, cpad), x.dtype),
            grid_spec=pltpu.PrefetchScalarGridSpec(
                num_scalar_prefetch=0,
                grid=grid,
                in_specs=in_specs,
                out_specs=out_specs,
                scratch_shapes=scratch,
            ),
            compiler_params=pltpu.CompilerParams(
                dimension_semantics=dims,
                vmem_limit_bytes=vmem_limit,
            ),
        )(feature, w_pack, b_pack)

    try:
        y_pad = _run(True)
    except Exception:
        # pipeline_mode=pl.Buffered(1) not supported by this build: fall back to
        # default double-buffered specs (budget already sized for that case).
        y_pad = _run(False)

    y_hat = y_pad[:, :nb_classes] if cpad != nb_classes else y_pad
    if return_feature:
        return y_hat, feature
    return y_hat


if __name__ == "__main__":
    # Shapes consistent with the module's forward:
    #   x: (N=2, C=4, H=16, W=16) -> fc_in_dim = 1024, nb_classes = 10
    N, C, H, W = 2, 4, 16, 16
    fc_in_dim = C * H * W
    nb_classes = 10

    key = jax.random.PRNGKey(0)
    kx, kw, kb = jax.random.split(key, 3)

    x = jax.random.normal(kx, (N, C, H, W), dtype=jnp.float32)
    # nn.Linear-style init (uniform in +/- 1/sqrt(fan_in))
    bound = 1.0 / (fc_in_dim ** 0.5)
    w = jax.random.uniform(kw, (nb_classes, fc_in_dim), jnp.float32, -bound, bound)
    b = jax.random.uniform(kb, (nb_classes,), jnp.float32, -bound, bound)

    # Pack W/b once (hoisted out of the forward): pre-transpose to (K, Cpad),
    # pad classes to 128, cast to bf16.
    w_pack, b_pack = pack_linear_params(w, b, compute_dtype=jnp.bfloat16)

    y_hat, feature = classify_forward(x, w_pack, b_pack, nb_classes,
                                      return_feature=True)
    y_hat = jax.block_until_ready(y_hat)

    # Reference 1: same bf16-rounded operands, f32 accumulation (tight check).
    f_r = feature.astype(jnp.bfloat16).astype(jnp.float32)
    w_r = w.astype(jnp.bfloat16).astype(jnp.float32)
    y_ref_rounded = jnp.dot(f_r, w_r.T, precision=jax.lax.Precision.HIGHEST) + b
    assert jnp.allclose(y_hat, y_ref_rounded, atol=1e-4, rtol=1e-4), \
        "mismatch vs bf16-operand reference"

    # Reference 2: full f32 nn.Linear semantics (loose — bf16 operand quantization).
    y_ref_f32 = feature @ w.T + b
    assert jnp.allclose(y_hat, y_ref_f32, atol=5e-2, rtol=5e-2), \
        "mismatch vs f32 reference"

    assert feature.shape == (N, fc_in_dim) and y_hat.shape == (N, nb_classes)

    # TODO(synk): the reference Component's optimizer / lr_scheduler / grad-clip
    # machinery is training-time glue with no Pallas equivalent (forward only).
    # TODO(synk): the feature_extractor nn.Module is abstract in the spec; it is
    # realized here as the NCHW flatten implied by fc_in_dim = C*H*W.
    print("KERNEL_OK")
</pallas_src>

<mosaic_0001>
module attributes {stable_mosaic.version = 11 : i64} {
  func.func @_classify_onepass_kernel(%arg0: i32, %arg1: memref<2x1024xf32, #tpu.memory_space<vmem>>, %arg2: memref<1024x128xbf16, #tpu.memory_space<vmem>>, %arg3: memref<1x128xf32, #tpu.memory_space<vmem>>, %arg4: memref<2x128xf32, #tpu.memory_space<vmem>>) attributes {dimension_semantics = [#tpu.dimension_semantics<parallel>], iteration_bounds = array<i64: 1>, scalar_prefetch = 0 : i64, scratch_operands = 0 : i64, tpu.core_type = #tpu.core_type<tc>, window_params = [{transform_indices = @transform_0, window_bounds = array<i64: 2, 1024>}, {pipeline_mode = #tpu.pipeline_mode<synchronous>, transform_indices = @transform_1, window_bounds = array<i64: 1024, 128>}, {pipeline_mode = #tpu.pipeline_mode<synchronous>, transform_indices = @transform_2, window_bounds = array<i64: 1, 128>}, {transform_indices = @transform_3, window_bounds = array<i64: 2, 128>}]} {
    %c0 = arith.constant 0 : index
    %c0_0 = arith.constant 0 : index
    %0 = vector.load %arg1[%c0, %c0_0] : memref<2x1024xf32, #tpu.memory_space<vmem>>, vector<2x1024xf32>
    %1 = arith.truncf %0 : vector<2x1024xf32> to vector<2x1024xbf16>
    %c0_1 = arith.constant 0 : index
    %c0_2 = arith.constant 0 : index
    %2 = vector.load %arg2[%c0_1, %c0_2] : memref<1024x128xbf16, #tpu.memory_space<vmem>>, vector<1024x128xbf16>
    %cst = arith.constant dense<0.000000e+00> : vector<2x128xf32>
    %3 = tpu.matmul %1, %2, %cst {dimension_numbers = #tpu.dot_dimension_numbers<[1], [0], [0], [1], [0, 0, 1, 1], [], []>} : vector<2x1024xbf16>, vector<1024x128xbf16>, vector<2x128xf32> -> vector<2x128xf32>
    %c0_3 = arith.constant 0 : index
    %c0_4 = arith.constant 0 : index
    %4 = vector.load %arg3[%c0_3, %c0_4] : memref<1x128xf32, #tpu.memory_space<vmem>>, vector<1x128xf32>
    %5 = vector.broadcast %4 : vector<1x128xf32> to vector<2x128xf32>
    %6 = arith.addf %3, %5 : vector<2x128xf32>
    %c0_5 = arith.constant 0 : index
    %c0_6 = arith.constant 0 : index
    %7 = vector.load %arg4[%c0_5, %c0_6] : memref<2x128xf32, #tpu.memory_space<vmem>>, vector<2x128xf32>
    tpu.vector_store %arg4[%c0_5, %c0_6], %6 {strides = array<i32>} : memref<2x128xf32, #tpu.memory_space<vmem>>, vector<2x128xf32>,
    return
  }
  func.func @transform_0(%arg0: i32) -> (i32, i32) {
    %c0_i32 = arith.constant 0 : i32
    %c0_i32_0 = arith.constant 0 : i32
    return %arg0, %c0_i32 : i32, i32
  }
  func.func @transform_1(%arg0: i32) -> (i32, i32) {
    %c0_i32 = arith.constant 0 : i32
    %c0_i32_0 = arith.constant 0 : i32
    %c0_i32_1 = arith.constant 0 : i32
    return %c0_i32, %c0_i32_0 : i32, i32
  }
  func.func @transform_2(%arg0: i32) -> (i32, i32) {
    %c0_i32 = arith.constant 0 : i32
    %c0_i32_0 = arith.constant 0 : i32
    %c0_i32_1 = arith.constant 0 : i32
    return %c0_i32, %c0_i32_0 : i32, i32
  }
  func.func @transform_3(%arg0: i32) -> (i32, i32) {
    %c0_i32 = arith.constant 0 : i32
    %c0_i32_0 = arith.constant 0 : i32
    return %arg0, %c0_i32 : i32, i32
  }
}

module attributes {stable_mosaic.version = 11 : i64} {
  func.func @_classify_onepass_kernel(%arg0: i32, %arg1: memref<2x1024xf32, #tpu.memory_space<vmem>>, %arg2: memref<1024x128xbf16, #tpu.memory_space<vmem>>, %arg3: memref<1x128xf32, #tpu.memory_space<vmem>>, %arg4: memref<2x128xf32, #tpu.memory_space<vmem>>) attributes {dimension_semantics = [#tpu.dimension_semantics<parallel>], iteration_bounds = array<i64: 1>, scalar_prefetch = 0 : i64, scratch_operands = 0 : i64, tpu.core_type = #tpu.core_type<tc>, window_params = [{transform_indices = @transform_0, window_bounds = array<i64: 2, 1024>}, {pipeline_mode = #tpu.pipeline_mode<synchronous>, transform_indices = @transform_1, window_bounds = array<i64: 1024, 128>}, {pipeline_mode = #tpu.pipeline_mode<synchronous>, transform_indices = @transform_2, window_bounds = array<i64: 1, 128>}, {transform_indices = @transform_3, window_bounds = array<i64: 2, 128>}]} {
    %c0 = arith.constant 0 : index
    %c0_0 = arith.constant 0 : index
    %0 = vector.load %arg1[%c0, %c0_0] : memref<2x1024xf32, #tpu.memory_space<vmem>>, vector<2x1024xf32>
    %1 = arith.truncf %0 : vector<2x1024xf32> to vector<2x1024xbf16>
    %c0_1 = arith.constant 0 : index
    %c0_2 = arith.constant 0 : index
    %2 = vector.load %arg2[%c0_1, %c0_2] : memref<1024x128xbf16, #tpu.memory_space<vmem>>, vector<1024x128xbf16>
    %cst = arith.constant dense<0.000000e+00> : vector<2x128xf32>
    %3 = tpu.matmul %1, %2, %cst {dimension_numbers = #tpu.dot_dimension_numbers<[1], [0], [0], [1], [0, 0, 1, 1], [], []>} : vector<2x1024xbf16>, vector<1024x128xbf16>, vector<2x128xf32> -> vector<2x128xf32>
    %c0_3 = arith.constant 0 : index
    %c0_4 = arith.constant 0 : index
    %4 = vector.load %arg3[%c0_3, %c0_4] : memref<1x128xf32, #tpu.memory_space<vmem>>, vector<1x128xf32>
    %5 = vector.broadcast %4 : vector<1x128xf32> to vector<2x128xf32>
    %6 = arith.addf %3, %5 : vector<2x128xf32>
    %c0_5 = arith.constant 0 : index
    %c0_6 = arith.constant 0 : index
    %7 = vector.load %arg4[%c0_5, %c0_6] : memref<2x128xf32, #tpu.memory_space<vmem>>, vector<2x128xf32>
    tpu.vector_store %arg4[%c0_5, %c0_6], %6 {strides = array<i32>} : memref<2x128xf32, #tpu.memory_space<vmem>>, vector<2x128xf32>,
    return
  }
  func.func @transform_0(%arg0: i32) -> (i32, i32) {
    %c0_i32 = arith.constant 0 : i32
    %c0_i32_0 = arith.constant 0 : i32
    return %arg0, %c0_i32 : i32, i32
  }
  func.func @transform_1(%arg0: i32) -> (i32, i32) {
    %c0_i32 = arith.constant 0 : i32
    %c0_i32_0 = arith.constant 0 : i32
    %c0_i32_1 = arith.constant 0 : i32
    return %c0_i32, %c0_i32_0 : i32, i32
  }
  func.func @transform_2(%arg0: i32) -> (i32, i32) {
    %c0_i32 = arith.constant 0 : i32
    %c0_i32_0 = arith.constant 0 : i32
    %c0_i32_1 = arith.constant 0 : i32
    return %c0_i32, %c0_i32_0 : i32, i32
  }
  func.func @transform_3(%arg0: i32) -> (i32, i32) {
    %c0_i32 = arith.constant 0 : i32
    %c0_i32_0 = arith.constant 0 : i32
    return %arg0, %c0_i32 : i32, i32
  }
}

</mosaic_0001>

<llo_original>
// kernel: tpu_custom_call.1
$region0: #{tpu_custom_call.1}
  #allocation0 [shape = 'u32[]', space=smem, size = 0x4, offset = 0x4, fixed_abs, tag = 'smem constant byte address 0x4 - core index']
  #allocation1 [shape = 'u32[144,128]{1,0:T(1,128)}', space=vmem, size = 0x12000, scoped, tag = 'internal scratch']
  %s0 = inlined_call_operand.hbm [shape: f32[2,1024], index: 0, kind: input, shape index: {}]
  %s1 = inlined_call_operand.hbm [shape: bf16[1024,128], index: 1, kind: input, shape index: {}]
  %s2 = inlined_call_operand.vmem [shape: f32[1,128], index: 2, kind: input, shape index: {}]
  %s3 = inlined_call_operand.hbm [shape: f32[2,128], index: 3, kind: output, shape index: {}]
  %s4 = sld [smem:[#allocation0]]
  $region30: #{tpu_custom_call.1} parent=0
    _
  %s6 = ssub.s32 1, %s4
  %s7 = scalar_select 0, %s6, %s4
  $region1: #{tpu_custom_call.1} parent=0
    #allocation2 [shape = 'u8[8192]{0}', space=vmem, size = 0x2000, scoped, tag = 'input window, operand 0, single buffered']
    #allocation3 [shape = 's32[1]{0}', space=sflag, size = 0x4, scoped, tag = 'scoped memory for tpu_custom_call.1']
    #allocation4 [shape = 's32[1]{0}', space=sflag, size = 0x4, scoped, tag = 'scoped memory for tpu_custom_call.1']
    #allocation5 [shape = 'u8[262144]{0}', space=vmem, size = 0x40000, scoped, tag = 'input window, operand 1, single buffered']
    #allocation6 [shape = 's32[1]{0}', space=sflag, size = 0x4, scoped, tag = 'scoped memory for tpu_custom_call.1']
    #allocation7 [shape = 'u8[1024]{0}', space=vmem, size = 0x400, scoped, tag = 'output window, operand 0, single buffered']
    %8 = vsyncpa [#allocation3], 0
    %9 = vsyncpa [#allocation6], 0
    %10 = vsyncpa [#allocation4], 0
    // Predicated region
    $region2: #{tpu_custom_call.1} parent=1 // pred_check
      _
    $region3: #{tpu_custom_call.1} parent=1 // pred_check_branch
      %12 = sbr.rel (0) target = $region5
    $region4: #{tpu_custom_call.1} parent=1 // pred_region
      %s14 = ssub.s32 256, 256
      %15 = vsyncadd [#allocation3], %s14
      %s17 = sshll.u32 [#allocation2], 4
      %s18 = int_to_ptr.vmem [resolvable:$true] %s17
      %20 = dma.hbm_to_vmem [thread:$0]  %s0, 256, %s18, [#allocation3]
    $region5: #{tpu_custom_call.1} parent=1 // pred_fallthru
      _
    // Predicated region
    $region6: #{tpu_custom_call.1} parent=1 // pred_check
      _
    $region7: #{tpu_custom_call.1} parent=1 // pred_check_branch
      %22 = sbr.rel (0) target = $region9
    $region8: #{tpu_custom_call.1} parent=1 // pred_region
      %s24 = ssub.s32 8192, 8192
      %25 = vsyncadd [#allocation6], %s24
      %s26 = sshll.u32 [#allocation5], 4
      %s27 = int_to_ptr.vmem [resolvable:$true] %s26
      %32 = dma.hbm_to_vmem [thread:$0]  %s1, 8192, %s27, [#allocation6], 64, 64, 4
    $region9: #{tpu_custom_call.1} parent=1 // pred_fallthru
      _
    // Predicated region
    $region10: #{tpu_custom_call.1} parent=1 // pred_check
      _
    $region11: #{tpu_custom_call.1} parent=1 // pred_check_branch
      %34 = sbr.rel (0) target = $region13
    $region12: #{tpu_custom_call.1} parent=1 // pred_region
      _
    $region13: #{tpu_custom_call.1} parent=1 // pred_fallthru
      _
    // Predicated region
    $region14: #{tpu_custom_call.1} parent=1 // pred_check
      _
    $region15: #{tpu_custom_call.1} parent=1 // pred_check_branch
      %36 = sbr.rel (0) target = $region17
    $region16: #{tpu_custom_call.1} parent=1 // pred_region
      %37 = dma.done [#allocation3], 256
    $region17: #{tpu_custom_call.1} parent=1 // pred_fallthru
      _
    // Predicated region
    $region18: #{tpu_custom_call.1} parent=1 // pred_check
      _
    $region19: #{tpu_custom_call.1} parent=1 // pred_check_branch
      %39 = sbr.rel (0) target = $region21
    $region20: #{tpu_custom_call.1} parent=1 // pred_region
      %40 = dma.done [#allocation6], 8192
    $region21: #{tpu_custom_call.1} parent=1 // pred_fallthru
      _
    %v42 = vld [vmem:[#allocation2] sm:$0xff]
    %v43 = vld [vmem:[#allocation2 + $0x8] sm:$0xff]
    %v46 = vcombine.high %v42, %v42
    %v48 = vunpack.c.l.s4 1983009808
    %v49 = vunpack.c.0.s8 %v48
    %v50 = vlaneseq
    %v51 = vshrl.u32 %v50, 7
    %v52 = vsub.s32 %v49, %v51
    %v53 = vrot.slane %v42, %v52
    %v55 = vunpack.c.l.s4 1983009808
    %v56 = vunpack.c.0.s8 %v55
    %v57 = vlaneseq
    %v58 = vshrl.u32 %v57, 7
    %v59 = vsub.s32 %v56, %v58
    %v60 = vrot.slane %v46, %v59
    %v61 = vcombine.high %v53, %v53
    %v62 = vcombine.high %v60, %v60
    %v63 = vcombine.high %v43, %v43
    %v65 = vunpack.c.l.s4 1983009808
    %v66 = vunpack.c.0.s8 %v65
    %v67 = vlaneseq
    %v68 = vshrl.u32 %v67, 7
    %v69 = vsub.s32 %v66, %v68
    %v70 = vrot.slane %v43, %v69
    %v72 = vunpack.c.l.s4 1983009808
    %v73 = vunpack.c.0.s8 %v72
    %v74 = vlaneseq
    %v75 = vshrl.u32 %v74, 7
    %v76 = vsub.s32 %v73, %v75
    %v77 = vrot.slane %v63, %v76
    %v78 = vcombine.high %v70, %v70
    %v79 = vcombine.high %v77, %v77
    %v88 = vpack.c.bf16 %v53, %v53
    %v89 = vpack.c.bf16 %v61, %v61
    %v90 = vpack.c.bf16 %v60, %v60
    %v91 = vpack.c.bf16 %v62, %v62
    %v92 = vpack.c.bf16 %v70, %v70
    %v93 = vpack.c.bf16 %v78, %v78
    %v94 = vpack.c.bf16 %v77, %v77
    %v95 = vpack.c.bf16 %v79, %v79
    %v96 = vld [vmem:[#allocation5] sm:$0xf]
    %v97 = vld [vmem:[#allocation5 + $0x4] sm:$0xf]
    %v98 = vld [vmem:[#allocation5 + $0x8] sm:$0xf]
    %v99 = vld [vmem:[#allocation5 + $0xc] sm:$0xf]
    %v100 = vld [vmem:[#allocation5 + $0x10] sm:$0xf]
    %v101 = vld [vmem:[#allocation5 + $0x14] sm:$0xf]
    %v102 = vld [vmem:[#allocation5 + $0x18] sm:$0xf]
    %v103 = vld [vmem:[#allocation5 + $0x1c] sm:$0xf]
    %v104 = vld [vmem:[#allocation5 + $0x20] sm:$0xf]
    %v105 = vld [vmem:[#allocation5 + $0x24] sm:$0xf]
    %v106 = vld [vmem:[#allocation5 + $0x28] sm:$0xf]
    %v107 = vld [vmem:[#allocation5 + $0x2c] sm:$0xf]
    %v108 = vld [vmem:[#allocation5 + $0x30] sm:$0xf]
    %v109 = vld [vmem:[#allocation5 + $0x34] sm:$0xf]
    %v110 = vld [vmem:[#allocation5 + $0x38] sm:$0xf]
    %v111 = vld [vmem:[#allocation5 + $0x3c] sm:$0xf]
    %v112 = vld [vmem:[#allocation5 + $0x40] sm:$0xf]
    %v113 = vld [vmem:[#allocation5 + $0x44] sm:$0xf]
    %v114 = vld [vmem:[#allocation5 + $0x48] sm:$0xf]
    %v115 = vld [vmem:[#allocation5 + $0x4c] sm:$0xf]
    %v116 = vld [vmem:[#allocation5 + $0x50] sm:$0xf]
    %v117 = vld [vmem:[#allocation5 + $0x54] sm:$0xf]
    %v118 = vld [vmem:[#allocation5 + $0x58] sm:$0xf]
    %v119 = vld [vmem:[#allocation5 + $0x5c] sm:$0xf]
    %v120 = vld [vmem:[#allocation5 + $0x60] sm:$0xf]
    %v121 = vld [vmem:[#allocation5 + $0x64] sm:$0xf]
    %v122 = vld [vmem:[#allocation5 + $0x68] sm:$0xf]
    %v123 = vld [vmem:[#allocation5 + $0x6c] sm:$0xf]
    %v124 = vld [vmem:[#allocation5 + $0x70] sm:$0xf]
    %v125 = vld [vmem:[#allocation5 + $0x74] sm:$0xf]
    %v126 = vld [vmem:[#allocation5 + $0x78] sm:$0xf]
    %v127 = vld [vmem:[#allocation5 + $0x7c] sm:$0xf]
    %v128 = vld [vmem:[#allocation5 + $0x80] sm:$0xf]
    %v129 = vld [vmem:[#allocation5 + $0x84] sm:$0xf]
    %v130 = vld [vmem:[#allocation5 + $0x88] sm:$0xf]
    %v131 = vld [vmem:[#allocation5 + $0x8c] sm:$0xf]
    %v132 = vld [vmem:[#allocation5 + $0x90] sm:$0xf]
    %v133 = vld [vmem:[#allocation5 + $0x94] sm:$0xf]
    %v134 = vld [vmem:[#allocation5 + $0x98] sm:$0xf]
    %v135 = vld [vmem:[#allocation5 + $0x9c] sm:$0xf]
    %v136 = vld [vmem:[#allocation5 + $0xa0] sm:$0xf]
    %v137 = vld [vmem:[#allocation5 + $0xa4] sm:$0xf]
    %v138 = vld [vmem:[#allocation5 + $0xa8] sm:$0xf]
    %v139 = vld [vmem:[#allocation5 + $0xac] sm:$0xf]
    %v140 = vld [vmem:[#allocation5 + $0xb0] sm:$0xf]
    %v141 = vld [vmem:[#allocation5 + $0xb4] sm:$0xf]
    %v142 = vld [vmem:[#allocation5 + $0xb8] sm:$0xf]
    %v143 = vld [vmem:[#allocation5 + $0xbc] sm:$0xf]
    %v144 = vld [vmem:[#allocation5 + $0xc0] sm:$0xf]
    %v145 = vld [vmem:[#allocation5 + $0xc4] sm:$0xf]
    %v146 = vld [vmem:[#allocation5 + $0xc8] sm:$0xf]
    %v147 = vld [vmem:[#allocation5 + $0xcc] sm:$0xf]
    %v148 = vld [vmem:[#allocation5 + $0xd0] sm:$0xf]
    %v149 = vld [vmem:[#allocation5 + $0xd4] sm:$0xf]
    %v150 = vld [vmem:[#allocation5 + $0xd8] sm:$0xf]
    %v151 = vld [vmem:[#allocation5 + $0xdc] sm:$0xf]
    %v152 = vld [vmem:[#allocation5 + $0xe0] sm:$0xf]
    %v153 = vld [vmem:[#allocation5 + $0xe4] sm:$0xf]
    %v154 = vld [vmem:[#allocation5 + $0xe8] sm:$0xf]
    %v155 = vld [vmem:[#allocation5 + $0xec] sm:$0xf]
    %v156 = vld [vmem:[#allocation5 + $0xf0] sm:$0xf]
    %v157 = vld [vmem:[#allocation5 + $0xf4] sm:$0xf]
    %v158 = vld [vmem:[#allocation5 + $0xf8] sm:$0xf]
    %v159 = vld [vmem:[#allocation5 + $0xfc] sm:$0xf]
    %v160 = vld [vmem:[#allocation5 + $0x100] sm:$0xf]
    %v161 = vld [vmem:[#allocation5 + $0x104] sm:$0xf]
    %v162 = vld [vmem:[#allocation5 + $0x108] sm:$0xf]
    %v163 = vld [vmem:[#allocation5 + $0x10c] sm:$0xf]
    %v164 = vld [vmem:[#allocation5 + $0x110] sm:$0xf]
    %v165 = vld [vmem:[#allocation5 + $0x114] sm:$0xf]
    %v166 = vld [vmem:[#allocation5 + $0x118] sm:$0xf]
    %v167 = vld [vmem:[#allocation5 + $0x11c] sm:$0xf]
    %v168 = vld [vmem:[#allocation5 + $0x120] sm:$0xf]
    %v169 = vld [vmem:[#allocation5 + $0x124] sm:$0xf]
    %v170 = vld [vmem:[#allocation5 + $0x128] sm:$0xf]
    %v171 = vld [vmem:[#allocation5 + $0x12c] sm:$0xf]
    %v172 = vld [vmem:[#allocation5 + $0x130] sm:$0xf]
    %v173 = vld [vmem:[#allocation5 + $0x134] sm:$0xf]
    %v174 = vld [vmem:[#allocation5 + $0x138] sm:$0xf]
    %v175 = vld [vmem:[#allocation5 + $0x13c] sm:$0xf]
    %v176 = vld [vmem:[#allocation5 + $0x140] sm:$0xf]
    %v177 = vld [vmem:[#allocation5 + $0x144] sm:$0xf]
    %v178 = vld [vmem:[#allocation5 + $0x148] sm:$0xf]
    %v179 = vld [vmem:[#allocation5 + $0x14c] sm:$0xf]
    %v180 = vld [vmem:[#allocation5 + $0x150] sm:$0xf]
    %v181 = vld [vmem:[#allocation5 + $0x154] sm:$0xf]
    %v182 = vld [vmem:[#allocation5 + $0x158] sm:$0xf]
    %v183 = vld [vmem:[#allocation5 + $0x15c] sm:$0xf]
    %v184 = vld [vmem:[#allocation5 + $0x160] sm:$0xf]
    %v185 = vld [vmem:[#allocation5 + $0x164] sm:$0xf]
    %v186 = vld [vmem:[#allocation5 + $0x168] sm:$0xf]
    %v187 = vld [vmem:[#allocation5 + $0x16c] sm:$0xf]
    %v188 = vld [vmem:[#allocation5 + $0x170] sm:$0xf]
    %v189 = vld [vmem:[#allocation5 + $0x174] sm:$0xf]
    %v190 = vld [vmem:[#allocation5 + $0x178] sm:$0xf]
    %v191 = vld [vmem:[#allocation5 + $0x17c] sm:$0xf]
    %v192 = vld [vmem:[#allocation5 + $0x180] sm:$0xf]
    %v193 = vld [vmem:[#allocation5 + $0x184] sm:$0xf]
    %v194 = vld [vmem:[#allocation5 + $0x188] sm:$0xf]
    %v195 = vld [vmem:[#allocation5 + $0x18c] sm:$0xf]
    %v196 = vld [vmem:[#allocation5 + $0x190] sm:$0xf]
    %v197 = vld [vmem:[#allocation5 + $0x194] sm:$0xf]
    %v198 = vld [vmem:[#allocation5 + $0x198] sm:$0xf]
    %v199 = vld [vmem:[#allocation5 + $0x19c] sm:$0xf]
    %v200 = vld [vmem:[#allocation5 + $0x1a0] sm:$0xf]
    %v201 = vld [vmem:[#allocation5 + $0x1a4] sm:$0xf]
    %v202 = vld [vmem:[#allocation5 + $0x1a8] sm:$0xf]
    %v203 = vld [vmem:[#allocation5 + $0x1ac] sm:$0xf]
    %v204 = vld [vmem:[#allocation5 + $0x1b0] sm:$0xf]
    %v205 = vld [vmem:[#allocation5 + $0x1b4] sm:$0xf]
    %v206 = vld [vmem:[#allocation5 + $0x1b8] sm:$0xf]
    %v207 = vld [vmem:[#allocation5 + $0x1bc] sm:$0xf]
    %v208 = vld [vmem:[#allocation5 + $0x1c0] sm:$0xf]
    %v209 = vld [vmem:[#allocation5 + $0x1c4] sm:$0xf]
    %v210 = vld [vmem:[#allocation5 + $0x1c8] sm:$0xf]
    %v211 = vld [vmem:[#allocation5 + $0x1cc] sm:$0xf]
    %v212 = vld [vmem:[#allocation5 + $0x1d0] sm:$0xf]
    %v213 = vld [vmem:[#allocation5 + $0x1d4] sm:$0xf]
    %v214 = vld [vmem:[#allocation5 + $0x1d8] sm:$0xf]
    %v215 = vld [vmem:[#allocation5 + $0x1dc] sm:$0xf]
    %v216 = vld [vmem:[#allocation5 + $0x1e0] sm:$0xf]
    %v217 = vld [vmem:[#allocation5 + $0x1e4] sm:$0xf]
    %v218 = vld [vmem:[#allocation5 + $0x1e8] sm:$0xf]
    %v219 = vld [vmem:[#allocation5 + $0x1ec] sm:$0xf]
    %v220 = vld [vmem:[#allocation5 + $0x1f0] sm:$0xf]
    %v221 = vld [vmem:[#allocation5 + $0x1f4] sm:$0xf]
    %v222 = vld [vmem:[#allocation5 + $0x1f8] sm:$0xf]
    %v223 = vld [vmem:[#allocation5 + $0x1fc] sm:$0xf]
    %v224 = vld [vmem:[%s2] sm:$0x1]
    %v226 = vlaneseq
    %v227 = vshrl.u32 %v226, 7
    %v228 = vsub.s32 0, %v227
    %v229 = vrot.slane %v224, %v228
    %v359 = vunpack.c.l.b16 %v96
    %v360 = vunpack.c.l.b16 %v97
    %v361 = vunpack.c.l.b16 %v98
    %v362 = vunpack.c.l.b16 %v99
    %v363 = vunpack.c.l.b16 %v100
    %v364 = vunpack.c.l.b16 %v101
    %v365 = vunpack.c.l.b16 %v102
    %v366 = vunpack.c.l.b16 %v103
    %v367 = vunpack.c.l.b16 %v104
    %v368 = vunpack.c.l.b16 %v105
    %v369 = vunpack.c.l.b16 %v106
    %v370 = vunpack.c.l.b16 %v107
    %v371 = vunpack.c.l.b16 %v108
    %v372 = vunpack.c.l.b16 %v109
    %v373 = vunpack.c.l.b16 %v110
    %v374 = vunpack.c.l.b16 %v111
    %v375 = vunpack.c.l.b16 %v112
    %v376 = vunpack.c.l.b16 %v113
    %v377 = vunpack.c.l.b16 %v114
    %v378 = vunpack.c.l.b16 %v115
    %v379 = vunpack.c.l.b16 %v116
    %v380 = vunpack.c.l.b16 %v117
    %v381 = vunpack.c.l.b16 %v118
    %v382 = vunpack.c.l.b16 %v119
    %v383 = vunpack.c.l.b16 %v120
    %v384 = vunpack.c.l.b16 %v121
    %v385 = vunpack.c.l.b16 %v122
    %v386 = vunpack.c.l.b16 %v123
    %v387 = vunpack.c.l.b16 %v124
    %v388 = vunpack.c.l.b16 %v125
    %v389 = vunpack.c.l.b16 %v126
    %v390 = vunpack.c.l.b16 %v127
    %v391 = vunpack.c.l.b16 %v128
    %v392 = vunpack.c.l.b16 %v129
    %v393 = vunpack.c.l.b16 %v130
    %v394 = vunpack.c.l.b16 %v131
    %v395 = vunpack.c.l.b16 %v132
    %v396 = vunpack.c.l.b16 %v133
    %v397 = vunpack.c.l.b16 %v134
    %v398 = vunpack.c.l.b16 %v135
    %v399 = vunpack.c.l.b16 %v136
    %v400 = vunpack.c.l.b16 %v137
    %v401 = vunpack.c.l.b16 %v138
    %v402 = vunpack.c.l.b16 %v139
    %v403 = vunpack.c.l.b16 %v140
    %v404 = vunpack.c.l.b16 %v141
    %v405 = vunpack.c.l.b16 %v142
    %v406 = vunpack.c.l.b16 %v143
    %v407 = vunpack.c.l.b16 %v144
    %v408 = vunpack.c.l.b16 %v145
    %v409 = vunpack.c.l.b16 %v146
    %v410 = vunpack.c.l.b16 %v147
    %v411 = vunpack.c.l.b16 %v148
    %v412 = vunpack.c.l.b16 %v149
    %v413 = vunpack.c.l.b16 %v150
    %v414 = vunpack.c.l.b16 %v151
    %v415 = vunpack.c.l.b16 %v152
    %v416 = vunpack.c.l.b16 %v153
    %v417 = vunpack.c.l.b16 %v154
    %v418 = vunpack.c.l.b16 %v155
    %v419 = vunpack.c.l.b16 %v156
    %v420 = vunpack.c.l.b16 %v157
    %v421 = vunpack.c.l.b16 %v158
    %v422 = vunpack.c.l.b16 %v159
    %v423 = vunpack.c.l.b16 %v160
    %v424 = vunpack.c.l.b16 %v161
    %v425 = vunpack.c.l.b16 %v162
    %v426 = vunpack.c.l.b16 %v163
    %v427 = vunpack.c.l.b16 %v164
    %v428 = vunpack.c.l.b16 %v165
    %v429 = vunpack.c.l.b16 %v166
    %v430 = vunpack.c.l.b16 %v167
    %v431 = vunpack.c.l.b16 %v168
    %v432 = vunpack.c.l.b16 %v169
    %v433 = vunpack.c.l.b16 %v170
    %v434 = vunpack.c.l.b16 %v171
    %v435 = vunpack.c.l.b16 %v172
    %v436 = vunpack.c.l.b16 %v173
    %v437 = vunpack.c.l.b16 %v174
    %v438 = vunpack.c.l.b16 %v175
    %v439 = vunpack.c.l.b16 %v176
    %v440 = vunpack.c.l.b16 %v177
    %v441 = vunpack.c.l.b16 %v178
    %v442 = vunpack.c.l.b16 %v179
    %v443 = vunpack.c.l.b16 %v180
    %v444 = vunpack.c.l.b16 %v181
    %v445 = vunpack.c.l.b16 %v182
    %v446 = vunpack.c.l.b16 %v183
    %v447 = vunpack.c.l.b16 %v184
    %v448 = vunpack.c.l.b16 %v185
    %v449 = vunpack.c.l.b16 %v186
    %v450 = vunpack.c.l.b16 %v187
    %v451 = vunpack.c.l.b16 %v188
    %v452 = vunpack.c.l.b16 %v189
    %v453 = vunpack.c.l.b16 %v190
    %v454 = vunpack.c.l.b16 %v191
    %v455 = vunpack.c.l.b16 %v192
    %v456 = vunpack.c.l.b16 %v193
    %v457 = vunpack.c.l.b16 %v194
    %v458 = vunpack.c.l.b16 %v195
    %v459 = vunpack.c.l.b16 %v196
    %v460 = vunpack.c.l.b16 %v197
    %v461 = vunpack.c.l.b16 %v198
    %v462 = vunpack.c.l.b16 %v199
    %v463 = vunpack.c.l.b16 %v200
    %v464 = vunpack.c.l.b16 %v201
    %v465 = vunpack.c.l.b16 %v202
    %v466 = vunpack.c.l.b16 %v203
    %v467 = vunpack.c.l.b16 %v204
    %v468 = vunpack.c.l.b16 %v205
    %v469 = vunpack.c.l.b16 %v206
    %v470 = vunpack.c.l.b16 %v207
    %v471 = vunpack.c.l.b16 %v208
    %v472 = vunpack.c.l.b16 %v209
    %v473 = vunpack.c.l.b16 %v210
    %v474 = vunpack.c.l.b16 %v211
    %v475 = vunpack.c.l.b16 %v212
    %v476 = vunpack.c.l.b16 %v213
    %v477 = vunpack.c.l.b16 %v214
    %v478 = vunpack.c.l.b16 %v215
    %v479 = vunpack.c.l.b16 %v216
    %v480 = vunpack.c.l.b16 %v217
    %v481 = vunpack.c.l.b16 %v218
    %v482 = vunpack.c.l.b16 %v219
    %v483 = vunpack.c.l.b16 %v220
    %v484 = vunpack.c.l.b16 %v221
    %v485 = vunpack.c.l.b16 %v222
    %v486 = vunpack.c.l.b16 %v223
    %v487 = vpack.c.b16 %v360, %v359
    %v488 = vpack.c.b16 %v362, %v361
    %v489 = vpack.c.b16 %v364, %v363
    %v490 = vpack.c.b16 %v366, %v365
    %v491 = vpack.c.b16 %v368, %v367
    %v492 = vpack.c.b16 %v370, %v369
    %v493 = vpack.c.b16 %v372, %v371
    %v494 = vpack.c.b16 %v374, %v373
    %v495 = vpack.c.b16 %v376, %v375
    %v496 = vpack.c.b16 %v378, %v377
    %v497 = vpack.c.b16 %v380, %v379
    %v498 = vpack.c.b16 %v382, %v381
    %v499 = vpack.c.b16 %v384, %v383
    %v500 = vpack.c.b16 %v386, %v385
    %v501 = vpack.c.b16 %v388, %v387
    %v502 = vpack.c.b16 %v390, %v389
    %v503 = vpack.c.b16 %v392, %v391
    %v504 = vpack.c.b16 %v394, %v393
    %v505 = vpack.c.b16 %v396, %v395
    %v506 = vpack.c.b16 %v398, %v397
    %v507 = vpack.c.b16 %v400, %v399
    %v508 = vpack.c.b16 %v402, %v401
    %v509 = vpack.c.b16 %v404, %v403
    %v510 = vpack.c.b16 %v406, %v405
    %v511 = vpack.c.b16 %v408, %v407
    %v512 = vpack.c.b16 %v410, %v409
    %v513 = vpack.c.b16 %v412, %v411
    %v514 = vpack.c.b16 %v414, %v413
    %v515 = vpack.c.b16 %v416, %v415
    %v516 = vpack.c.b16 %v418, %v417
    %v517 = vpack.c.b16 %v420, %v419
    %v518 = vpack.c.b16 %v422, %v421
    %v519 = vpack.c.b16 %v424, %v423
    %v520 = vpack.c.b16 %v426, %v425
    %v521 = vpack.c.b16 %v428, %v427
    %v522 = vpack.c.b16 %v430, %v429
    %v523 = vpack.c.b16 %v432, %v431
    %v524 = vpack.c.b16 %v434, %v433
    %v525 = vpack.c.b16 %v436, %v435
    %v526 = vpack.c.b16 %v438, %v437
    %v527 = vpack.c.b16 %v440, %v439
    %v528 = vpack.c.b16 %v442, %v441
    %v529 = vpack.c.b16 %v444, %v443
    %v530 = vpack.c.b16 %v446, %v445
    %v531 = vpack.c.b16 %v448, %v447
    %v532 = vpack.c.b16 %v450, %v449
    %v533 = vpack.c.b16 %v452, %v451
    %v534 = vpack.c.b16 %v454, %v453
    %v535 = vpack.c.b16 %v456, %v455
    %v536 = vpack.c.b16 %v458, %v457
    %v537 = vpack.c.b16 %v460, %v459
    %v538 = vpack.c.b16 %v462, %v461
    %v539 = vpack.c.b16 %v464, %v463
    %v540 = vpack.c.b16 %v466, %v465
    %v541 = vpack.c.b16 %v468, %v467
    %v542 = vpack.c.b16 %v470, %v469
    %v543 = vpack.c.b16 %v472, %v471
    %v544 = vpack.c.b16 %v474, %v473
    %v545 = vpack.c.b16 %v476, %v475
    %v546 = vpack.c.b16 %v478, %v477
    %v547 = vpack.c.b16 %v480, %v479
    %v548 = vpack.c.b16 %v482, %v481
    %v549 = vpack.c.b16 %v484, %v483
    %v550 = vpack.c.b16 %v486, %v485
    %615 = vmatprep.subr.bf16.mxu0 0
    %616 = vmatpush1.bf16.msra.mxu0 %v494
    %617 = vmatprep.subr.bf16.mxu0 0
    %618 = vmatpush1.bf16.msra.mxu0 %v493
    %619 = vmatprep.subr.bf16.mxu0 0
    %620 = vmatpush1.bf16.msra.mxu0 %v492
    %621 = vmatprep.subr.bf16.mxu0 0
    %622 = vmatpush1.bf16.msra.mxu0 %v491
    %623 = vmatprep.subr.bf16.mxu0 0
    %624 = vmatpush1.bf16.msra.mxu0 %v490
    %625 = vmatprep.subr.bf16.mxu0 0
    %626 = vmatpush1.bf16.msra.mxu0 %v489
    %627 = vmatprep.subr.bf16.mxu0 0
    %628 = vmatpush1.bf16.msra.mxu0 %v488
    %629 = vmatprep.subr.bf16.mxu0 0
    %630 = vmatpush1.bf16.msra.mxu0 %v487
    %631 = vmatprep.subr.bf16.mxu0 0
    %632 = vmatpush2.bf16.msra.mxu0 %v502
    %633 = vmatprep.subr.bf16.mxu0 0
    %634 = vmatpush2.bf16.msra.mxu0 %v501
    %635 = vmatprep.subr.bf16.mxu0 0
    %636 = vmatpush2.bf16.msra.mxu0 %v500
    %637 = vmatprep.subr.bf16.mxu0 0
    %638 = vmatpush2.bf16.msra.mxu0 %v499
    %639 = vmatprep.subr.bf16.mxu0 0
    %640 = vmatpush2.bf16.msra.mxu0 %v498
    %641 = vmatprep.subr.bf16.mxu0 0
    %642 = vmatpush2.bf16.msra.mxu0 %v497
    %643 = vmatprep.subr.bf16.mxu0 0
    %644 = vmatpush2.bf16.msra.mxu0 %v496
    %645 = vmatprep.subr.bf16.mxu0 0
    %646 = vmatpush2.bf16.msra.mxu0 %v495
    %647 = vmatprep.mubr.bf16.mxu0 %v89
    %648 = vmatmul.mubr.bf16.gmra.mxu0 %v88
    %v649 = vpop.f32.mrf.mxu0
    %v650 = vadd.f32 %v229, %v649
    %v651 = vpop.f32.mrf.mxu0
    %v652 = vpop.f32.mrf.mxu0
    %v653 = vpop.f32.mrf.mxu0
    %654 = vdwg.mxu0
    %655 = vmatprep.subr.bf16.mxu0 0
    %656 = vmatpush1.bf16.msra.mxu0 %v510
    %657 = vmatprep.subr.bf16.mxu0 0
    %658 = vmatpush1.bf16.msra.mxu0 %v509
    %659 = vmatprep.subr.bf16.mxu0 0
    %660 = vmatpush1.bf16.msra.mxu0 %v508
    %661 = vmatprep.subr.bf16.mxu0 0
    %662 = vmatpush1.bf16.msra.mxu0 %v507
    %663 = vmatprep.subr.bf16.mxu0 0
    %664 = vmatpush1.bf16.msra.mxu0 %v506
    %665 = vmatprep.subr.bf16.mxu0 0
    %666 = vmatpush1.bf16.msra.mxu0 %v505
    %667 = vmatprep.subr.bf16.mxu0 0
    %668 = vmatpush1.bf16.msra.mxu0 %v504
    %669 = vmatprep.subr.bf16.mxu0 0
    %670 = vmatpush1.bf16.msra.mxu0 %v503
    %671 = vmatprep.subr.bf16.mxu0 0
    %672 = vmatpush2.bf16.msra.mxu0 %v518
    %673 = vmatprep.subr.bf16.mxu0 0
    %674 = vmatpush2.bf16.msra.mxu0 %v517
    %675 = vmatprep.subr.bf16.mxu0 0
    %676 = vmatpush2.bf16.msra.mxu0 %v516
    %677 = vmatprep.subr.bf16.mxu0 0
    %678 = vmatpush2.bf16.msra.mxu0 %v515
    %679 = vmatprep.subr.bf16.mxu0 0
    %680 = vmatpush2.bf16.msra.mxu0 %v514
    %681 = vmatprep.subr.bf16.mxu0 0
    %682 = vmatpush2.bf16.msra.mxu0 %v513
    %683 = vmatprep.subr.bf16.mxu0 0
    %684 = vmatpush2.bf16.msra.mxu0 %v512
    %685 = vmatprep.subr.bf16.mxu0 0
    %686 = vmatpush2.bf16.msra.mxu0 %v511
    %687 = vmatprep.mubr.bf16.mxu0 %v91
    %688 = vmatmul.mubr.bf16.gmra.mxu0 %v90
    %v689 = vpop.f32.mrf.mxu0
    %v690 = vadd.f32 %v650, %v689
    %v691 = vpop.f32.mrf.mxu0
    %v692 = vpop.f32.mrf.mxu0
    %v693 = vpop.f32.mrf.mxu0
    %694 = vdwg.mxu0
    %695 = vmatprep.subr.bf16.mxu0 0
    %696 = vmatpush1.bf16.msra.mxu0 %v526
    %697 = vmatprep.subr.bf16.mxu0 0
    %698 = vmatpush1.bf16.msra.mxu0 %v525
    %699 = vmatprep.subr.bf16.mxu0 0
    %700 = vmatpush1.bf16.msra.mxu0 %v524
    %701 = vmatprep.subr.bf16.mxu0 0
    %702 = vmatpush1.bf16.msra.mxu0 %v523
    %703 = vmatprep.subr.bf16.mxu0 0
    %704 = vmatpush1.bf16.msra.mxu0 %v522
    %705 = vmatprep.subr.bf16.mxu0 0
    %706 = vmatpush1.bf16.msra.mxu0 %v521
    %707 = vmatprep.subr.bf16.mxu0 0
    %708 = vmatpush1.bf16.msra.mxu0 %v520
    %709 = vmatprep.subr.bf16.mxu0 0
    %710 = vmatpush1.bf16.msra.mxu0 %v519
    %711 = vmatprep.subr.bf16.mxu0 0
    %712 = vmatpush2.bf16.msra.mxu0 %v534
    %713 = vmatprep.subr.bf16.mxu0 0
    %714 = vmatpush2.bf16.msra.mxu0 %v533
    %715 = vmatprep.subr.bf16.mxu0 0
    %716 = vmatpush2.bf16.msra.mxu0 %v532
    %717 = vmatprep.subr.bf16.mxu0 0
    %718 = vmatpush2.bf16.msra.mxu0 %v531
    %719 = vmatprep.subr.bf16.mxu0 0
    %720 = vmatpush2.bf16.msra.mxu0 %v530
    %721 = vmatprep.subr.bf16.mxu0 0
    %722 = vmatpush2.bf16.msra.mxu0 %v529
    %723 = vmatprep.subr.bf16.mxu0 0
    %724 = vmatpush2.bf16.msra.mxu0 %v528
    %725 = vmatprep.subr.bf16.mxu0 0
    %726 = vmatpush2.bf16.msra.mxu0 %v527
    %727 = vmatprep.mubr.bf16.mxu0 %v93
    %728 = vmatmul.mubr.bf16.gmra.mxu0 %v92
    %v729 = vpop.f32.mrf.mxu0
    %v730 = vadd.f32 %v690, %v729
    %v731 = vpop.f32.mrf.mxu0
    %v732 = vpop.f32.mrf.mxu0
    %v733 = vpop.f32.mrf.mxu0
    %734 = vdwg.mxu0
    %735 = vmatprep.subr.bf16.mxu0 0
    %736 = vmatpush1.bf16.msra.mxu0 %v542
    %737 = vmatprep.subr.bf16.mxu0 0
    %738 = vmatpush1.bf16.msra.mxu0 %v541
    %739 = vmatprep.subr.bf16.mxu0 0
    %740 = vmatpush1.bf16.msra.mxu0 %v540
    %741 = vmatprep.subr.bf16.mxu0 0
    %742 = vmatpush1.bf16.msra.mxu0 %v539
    %743 = vmatprep.subr.bf16.mxu0 0
    %744 = vmatpush1.bf16.msra.mxu0 %v538
    %745 = vmatprep.subr.bf16.mxu0 0
    %746 = vmatpush1.bf16.msra.mxu0 %v537
    %747 = vmatprep.subr.bf16.mxu0 0
    %748 = vmatpush1.bf16.msra.mxu0 %v536
    %749 = vmatprep.subr.bf16.mxu0 0
    %750 = vmatpush1.bf16.msra.mxu0 %v535
    %751 = vmatprep.subr.bf16.mxu0 0
    %752 = vmatpush2.bf16.msra.mxu0 %v550
    %753 = vmatprep.subr.bf16.mxu0 0
    %754 = vmatpush2.bf16.msra.mxu0 %v549
    %755 = vmatprep.subr.bf16.mxu0 0
    %756 = vmatpush2.bf16.msra.mxu0 %v548
    %757 = vmatprep.subr.bf16.mxu0 0
    %758 = vmatpush2.bf16.msra.mxu0 %v547
    %759 = vmatprep.subr.bf16.mxu0 0
    %760 = vmatpush2.bf16.msra.mxu0 %v546
    %761 = vmatprep.subr.bf16.mxu0 0
    %762 = vmatpush2.bf16.msra.mxu0 %v545
    %763 = vmatprep.subr.bf16.mxu0 0
    %764 = vmatpush2.bf16.msra.mxu0 %v544
    %765 = vmatprep.subr.bf16.mxu0 0
    %766 = vmatpush2.bf16.msra.mxu0 %v543
    %767 = vmatprep.mubr.bf16.mxu0 %v95
    %768 = vmatmul.mubr.bf16.gmra.mxu0 %v94
    %v769 = vpop.f32.mrf.mxu0
    %v770 = vadd.f32 %v730, %v769
    %v771 = vpop.f32.mrf.mxu0
    %v772 = vpop.f32.mrf.mxu0
    %v773 = vpop.f32.mrf.mxu0
    %774 = vdwg.mxu0
    %775 = vst [vmem:[#allocation7] sm:$0x3] %v770
    // Predicated region
    $region22: #{tpu_custom_call.1} parent=1 // pred_check
      _
    $region23: #{tpu_custom_call.1} parent=1 // pred_check_branch
      %777 = sbr.rel (0) target = $region25
    $region24: #{tpu_custom_call.1} parent=1 // pred_region
      %s779 = ssub.s32 32, 32
      %780 = vsyncadd [#allocation4], %s779
      %s782 = sshll.u32 [#allocation7], 4
      %s783 = int_to_ptr.vmem [resolvable:$true] %s782
      %785 = dma.vmem_to_hbm [thread:$0]  %s783, 32, %s3, [#allocation4]
    $region25: #{tpu_custom_call.1} parent=1 // pred_fallthru
      _
    // Predicated region
    $region26: #{tpu_custom_call.1} parent=1 // pred_check
      _
    $region27: #{tpu_custom_call.1} parent=1 // pred_check_branch
      %787 = sbr.rel (0) target = $region29
    $region28: #{tpu_custom_call.1} parent=1 // pred_region
      %788 = dma.done [#allocation4], 32
    $region29: #{tpu_custom_call.1} parent=1 // pred_fallthru
      _
    %789 = vsyncpa [#allocation3], 1
    %790 = vsyncpa [#allocation6], 1
    %791 = vsyncpa [#allocation4], 1

// kernel: tpu_custom_call.1
$region0: #{tpu_custom_call.1}
  #allocation0 [shape = 'u32[]', space=smem, size = 0x4, offset = 0x4, fixed_abs, tag = 'smem constant byte address 0x4 - core index']
  #allocation1 [shape = 'u32[144,128]{1,0:T(1,128)}', space=vmem, size = 0x12000, scoped, tag = 'internal scratch']
  %s0 = inlined_call_operand.hbm [shape: f32[2,1024], index: 0, kind: input, shape index: {}]
  %s1 = inlined_call_operand.hbm [shape: bf16[1024,128], index: 1, kind: input, shape index: {}]
  %s2 = inlined_call_operand.vmem [shape: f32[1,128], index: 2, kind: input, shape index: {}]
  %s3 = inlined_call_operand.hbm [shape: f32[2,128], index: 3, kind: output, shape index: {}]
  %s4 = sld [smem:[#allocation0]]
  $region30: #{tpu_custom_call.1} parent=0
    _
  %s6 = ssub.s32 1, %s4
  %s7 = scalar_select 0, %s6, %s4
  $region1: #{tpu_custom_call.1} parent=0
    #allocation2 [shape = 'u8[8192]{0}', space=vmem, size = 0x2000, scoped, tag = 'input window, operand 0, single buffered']
    #allocation3 [shape = 's32[1]{0}', space=sflag, size = 0x4, scoped, tag = 'scoped memory for tpu_custom_call.1']
    #allocation4 [shape = 's32[1]{0}', space=sflag, size = 0x4, scoped, tag = 'scoped memory for tpu_custom_call.1']
    #allocation5 [shape = 'u8[262144]{0}', space=vmem, size = 0x40000, scoped, tag = 'input window, operand 1, single buffered']
    #allocation6 [shape = 's32[1]{0}', space=sflag, size = 0x4, scoped, tag = 'scoped memory for tpu_custom_call.1']
    #allocation7 [shape = 'u8[1024]{0}', space=vmem, size = 0x400, scoped, tag = 'output window, operand 0, single buffered']
    %8 = vsyncpa [#allocation3], 0
    %9 = vsyncpa [#allocation6], 0
    %10 = vsyncpa [#allocation4], 0
    // Predicated region
    $region2: #{tpu_custom_call.1} parent=1 // pred_check
      _
    $region3: #{tpu_custom_call.1} parent=1 // pred_check_branch
      %12 = sbr.rel (0) target = $region5
    $region4: #{tpu_custom_call.1} parent=1 // pred_region
      %s14 = ssub.s32 256, 256
      %15 = vsyncadd [#allocation3], %s14
      %s17 = sshll.u32 [#allocation2], 4
      %s18 = int_to_ptr.vmem [resolvable:$true] %s17
      %20 = dma.hbm_to_vmem [thread:$0]  %s0, 256, %s18, [#allocation3]
    $region5: #{tpu_custom_call.1} parent=1 // pred_fallthru
      _
    // Predicated region
    $region6: #{tpu_custom_call.1} parent=1 // pred_check
      _
    $region7: #{tpu_custom_call.1} parent=1 // pred_check_branch
      %22 = sbr.rel (0) target = $region9
    $region8: #{tpu_custom_call.1} parent=1 // pred_region
      %s24 = ssub.s32 8192, 8192
      %25 = vsyncadd [#allocation6], %s24
      %s26 = sshll.u32 [#allocation5], 4
      %s27 = int_to_ptr.vmem [resolvable:$true] %s26
      %32 = dma.hbm_to_vmem [thread:$0]  %s1, 8192, %s27, [#allocation6], 64, 64, 4
    $region9: #{tpu_custom_call.1} parent=1 // pred_fallthru
      _
    // Predicated region
    $region10: #{tpu_custom_call.1} parent=1 // pred_check
      _
    $region11: #{tpu_custom_call.1} parent=1 // pred_check_branch
      %34 = sbr.rel (0) target = $region13
    $region12: #{tpu_custom_call.1} parent=1 // pred_region
      _
    $region13: #{tpu_custom_call.1} parent=1 // pred_fallthru
      _
    // Predicated region
    $region14: #{tpu_custom_call.1} parent=1 // pred_check
      _
    $region15: #{tpu_custom_call.1} parent=1 // pred_check_branch
      %36 = sbr.rel (0) target = $region17
    $region16: #{tpu_custom_call.1} parent=1 // pred_region
      %37 = dma.done [#allocation3], 256
    $region17: #{tpu_custom_call.1} parent=1 // pred_fallthru
      _
    // Predicated region
    $region18: #{tpu_custom_call.1} parent=1 // pred_check
      _
    $region19: #{tpu_custom_call.1} parent=1 // pred_check_branch
      %39 = sbr.rel (0) target = $region21
    $region20: #{tpu_custom_call.1} parent=1 // pred_region
      %40 = dma.done [#allocation6], 8192
    $region21: #{tpu_custom_call.1} parent=1 // pred_fallthru
      _
    %v42 = vld [vmem:[#allocation2] sm:$0xff]
    %v43 = vld [vmem:[#allocation2 + $0x8] sm:$0xff]
    %v46 = vcombine.high %v42, %v42
    %v48 = vunpack.c.l.s4 1983009808
    %v49 = vunpack.c.0.s8 %v48
    %v50 = vlaneseq
    %v51 = vshrl.u32 %v50, 7
    %v52 = vsub.s32 %v49, %v51
    %v53 = vrot.slane %v42, %v52
    %v55 = vunpack.c.l.s4 1983009808
    %v56 = vunpack.c.0.s8 %v55
    %v57 = vlaneseq
    %v58 = vshrl.u32 %v57, 7
    %v59 = vsub.s32 %v56, %v58
    %v60 = vrot.slane %v46, %v59
    %v61 = vcombine.high %v53, %v53
    %v62 = vcombine.high %v60, %v60
    %v63 = vcombine.high %v43, %v43
    %v65 = vunpack.c.l.s4 1983009808
    %v66 = vunpack.c.0.s8 %v65
    %v67 = vlaneseq
    %v68 = vshrl.u32 %v67, 7
    %v69 = vsub.s32 %v66, %v68
    %v70 = vrot.slane %v43, %v69
    %v72 = vunpack.c.l.s4 1983009808
    %v73 = vunpack.c.0.s8 %v72
    %v74 = vlaneseq
    %v75 = vshrl.u32 %v74, 7
    %v76 = vsub.s32 %v73, %v75
    %v77 = vrot.slane %v63, %v76
    %v78 = vcombine.high %v70, %v70
    %v79 = vcombine.high %v77, %v77
    %v88 = vpack.c.bf16 %v53, %v53
    %v89 = vpack.c.bf16 %v61, %v61
    %v90 = vpack.c.bf16 %v60, %v60
    %v91 = vpack.c.bf16 %v62, %v62
    %v92 = vpack.c.bf16 %v70, %v70
    %v93 = vpack.c.bf16 %v78, %v78
    %v94 = vpack.c.bf16 %v77, %v77
    %v95 = vpack.c.bf16 %v79, %v79
    %v96 = vld [vmem:[#allocation5] sm:$0xf]
    %v97 = vld [vmem:[#allocation5 + $0x4] sm:$0xf]
    %v98 = vld [vmem:[#allocation5 + $0x8] sm:$0xf]
    %v99 = vld [vmem:[#allocation5 + $0xc] sm:$0xf]
    %v100 = vld [vmem:[#allocation5 + $0x10] sm:$0xf]
    %v101 = vld [vmem:[#allocation5 + $0x14] sm:$0xf]
    %v102 = vld [vmem:[#allocation5 + $0x18] sm:$0xf]
    %v103 = vld [vmem:[#allocation5 + $0x1c] sm:$0xf]
    %v104 = vld [vmem:[#allocation5 + $0x20] sm:$0xf]
    %v105 = vld [vmem:[#allocation5 + $0x24] sm:$0xf]
    %v106 = vld [vmem:[#allocation5 + $0x28] sm:$0xf]
    %v107 = vld [vmem:[#allocation5 + $0x2c] sm:$0xf]
    %v108 = vld [vmem:[#allocation5 + $0x30] sm:$0xf]
    %v109 = vld [vmem:[#allocation5 + $0x34] sm:$0xf]
    %v110 = vld [vmem:[#allocation5 + $0x38] sm:$0xf]
    %v111 = vld [vmem:[#allocation5 + $0x3c] sm:$0xf]
    %v112 = vld [vmem:[#allocation5 + $0x40] sm:$0xf]
    %v113 = vld [vmem:[#allocation5 + $0x44] sm:$0xf]
    %v114 = vld [vmem:[#allocation5 + $0x48] sm:$0xf]
    %v115 = vld [vmem:[#allocation5 + $0x4c] sm:$0xf]
    %v116 = vld [vmem:[#allocation5 + $0x50] sm:$0xf]
    %v117 = vld [vmem:[#allocation5 + $0x54] sm:$0xf]
    %v118 = vld [vmem:[#allocation5 + $0x58] sm:$0xf]
    %v119 = vld [vmem:[#allocation5 + $0x5c] sm:$0xf]
    %v120 = vld [vmem:[#allocation5 + $0x60] sm:$0xf]
    %v121 = vld [vmem:[#allocation5 + $0x64] sm:$0xf]
    %v122 = vld [vmem:[#allocation5 + $0x68] sm:$0xf]
    %v123 = vld [vmem:[#allocation5 + $0x6c] sm:$0xf]
    %v124 = vld [vmem:[#allocation5 + $0x70] sm:$0xf]
    %v125 = vld [vmem:[#allocation5 + $0x74] sm:$0xf]
    %v126 = vld [vmem:[#allocation5 + $0x78] sm:$0xf]
    %v127 = vld [vmem:[#allocation5 + $0x7c] sm:$0xf]
    %v128 = vld [vmem:[#allocation5 + $0x80] sm:$0xf]
    %v129 = vld [vmem:[#allocation5 + $0x84] sm:$0xf]
    %v130 = vld [vmem:[#allocation5 + $0x88] sm:$0xf]
    %v131 = vld [vmem:[#allocation5 + $0x8c] sm:$0xf]
    %v132 = vld [vmem:[#allocation5 + $0x90] sm:$0xf]
    %v133 = vld [vmem:[#allocation5 + $0x94] sm:$0xf]
    %v134 = vld [vmem:[#allocation5 + $0x98] sm:$0xf]
    %v135 = vld [vmem:[#allocation5 + $0x9c] sm:$0xf]
    %v136 = vld [vmem:[#allocation5 + $0xa0] sm:$0xf]
    %v137 = vld [vmem:[#allocation5 + $0xa4] sm:$0xf]
    %v138 = vld [vmem:[#allocation5 + $0xa8] sm:$0xf]
    %v139 = vld [vmem:[#allocation5 + $0xac] sm:$0xf]
    %v140 = vld [vmem:[#allocation5 + $0xb0] sm:$0xf]
    %v141 = vld [vmem:[#allocation5 + $0xb4] sm:$0xf]
    %v142 = vld [vmem:[#allocation5 + $0xb8] sm:$0xf]
    %v143 = vld [vmem:[#allocation5 + $0xbc] sm:$0xf]
    %v144 = vld [vmem:[#allocation5 + $0xc0] sm:$0xf]
    %v145 = vld [vmem:[#allocation5 + $0xc4] sm:$0xf]
    %v146 = vld [vmem:[#allocation5 + $0xc8] sm:$0xf]
    %v147 = vld [vmem:[#allocation5 + $0xcc] sm:$0xf]
    %v148 = vld [vmem:[#allocation5 + $0xd0] sm:$0xf]
    %v149 = vld [vmem:[#allocation5 + $0xd4] sm:$0xf]
    %v150 = vld [vmem:[#allocation5 + $0xd8] sm:$0xf]
    %v151 = vld [vmem:[#allocation5 + $0xdc] sm:$0xf]
    %v152 = vld [vmem:[#allocation5 + $0xe0] sm:$0xf]
    %v153 = vld [vmem:[#allocation5 + $0xe4] sm:$0xf]
    %v154 = vld [vmem:[#allocation5 + $0xe8] sm:$0xf]
    %v155 = vld [vmem:[#allocation5 + $0xec] sm:$0xf]
    %v156 = vld [vmem:[#allocation5 + $0xf0] sm:$0xf]
    %v157 = vld [vmem:[#allocation5 + $0xf4] sm:$0xf]
    %v158 = vld [vmem:[#allocation5 + $0xf8] sm:$0xf]
    %v159 = vld [vmem:[#allocation5 + $0xfc] sm:$0xf]
    %v160 = vld [vmem:[#allocation5 + $0x100] sm:$0xf]
    %v161 = vld [vmem:[#allocation5 + $0x104] sm:$0xf]
    %v162 = vld [vmem:[#allocation5 + $0x108] sm:$0xf]
    %v163 = vld [vmem:[#allocation5 + $0x10c] sm:$0xf]
    %v164 = vld [vmem:[#allocation5 + $0x110] sm:$0xf]
    %v165 = vld [vmem:[#allocation5 + $0x114] sm:$0xf]
    %v166 = vld [vmem:[#allocation5 + $0x118] sm:$0xf]
    %v167 = vld [vmem:[#allocation5 + $0x11c] sm:$0xf]
    %v168 = vld [vmem:[#allocation5 + $0x120] sm:$0xf]
    %v169 = vld [vmem:[#allocation5 + $0x124] sm:$0xf]
    %v170 = vld [vmem:[#allocation5 + $0x128] sm:$0xf]
    %v171 = vld [vmem:[#allocation5 + $0x12c] sm:$0xf]
    %v172 = vld [vmem:[#allocation5 + $0x130] sm:$0xf]
    %v173 = vld [vmem:[#allocation5 + $0x134] sm:$0xf]
    %v174 = vld [vmem:[#allocation5 + $0x138] sm:$0xf]
    %v175 = vld [vmem:[#allocation5 + $0x13c] sm:$0xf]
    %v176 = vld [vmem:[#allocation5 + $0x140] sm:$0xf]
    %v177 = vld [vmem:[#allocation5 + $0x144] sm:$0xf]
    %v178 = vld [vmem:[#allocation5 + $0x148] sm:$0xf]
    %v179 = vld [vmem:[#allocation5 + $0x14c] sm:$0xf]
    %v180 = vld [vmem:[#allocation5 + $0x150] sm:$0xf]
    %v181 = vld [vmem:[#allocation5 + $0x154] sm:$0xf]
    %v182 = vld [vmem:[#allocation5 + $0x158] sm:$0xf]
    %v183 = vld [vmem:[#allocation5 + $0x15c] sm:$0xf]
    %v184 = vld [vmem:[#allocation5 + $0x160] sm:$0xf]
    %v185 = vld [vmem:[#allocation5 + $0x164] sm:$0xf]
    %v186 = vld [vmem:[#allocation5 + $0x168] sm:$0xf]
    %v187 = vld [vmem:[#allocation5 + $0x16c] sm:$0xf]
    %v188 = vld [vmem:[#allocation5 + $0x170] sm:$0xf]
    %v189 = vld [vmem:[#allocation5 + $0x174] sm:$0xf]
    %v190 = vld [vmem:[#allocation5 + $0x178] sm:$0xf]
    %v191 = vld [vmem:[#allocation5 + $0x17c] sm:$0xf]
    %v192 = vld [vmem:[#allocation5 + $0x180] sm:$0xf]
    %v193 = vld [vmem:[#allocation5 + $0x184] sm:$0xf]
    %v194 = vld [vmem:[#allocation5 + $0x188] sm:$0xf]
    %v195 = vld [vmem:[#allocation5 + $0x18c] sm:$0xf]
    %v196 = vld [vmem:[#allocation5 + $0x190] sm:$0xf]
    %v197 = vld [vmem:[#allocation5 + $0x194] sm:$0xf]
    %v198 = vld [vmem:[#allocation5 + $0x198] sm:$0xf]
    %v199 = vld [vmem:[#allocation5 + $0x19c] sm:$0xf]
    %v200 = vld [vmem:[#allocation5 + $0x1a0] sm:$0xf]
    %v201 = vld [vmem:[#allocation5 + $0x1a4] sm:$0xf]
    %v202 = vld [vmem:[#allocation5 + $0x1a8] sm:$0xf]
    %v203 = vld [vmem:[#allocation5 + $0x1ac] sm:$0xf]
    %v204 = vld [vmem:[#allocation5 + $0x1b0] sm:$0xf]
    %v205 = vld [vmem:[#allocation5 + $0x1b4] sm:$0xf]
    %v206 = vld [vmem:[#allocation5 + $0x1b8] sm:$0xf]
    %v207 = vld [vmem:[#allocation5 + $0x1bc] sm:$0xf]
    %v208 = vld [vmem:[#allocation5 + $0x1c0] sm:$0xf]
    %v209 = vld [vmem:[#allocation5 + $0x1c4] sm:$0xf]
    %v210 = vld [vmem:[#allocation5 + $0x1c8] sm:$0xf]
    %v211 = vld [vmem:[#allocation5 + $0x1cc] sm:$0xf]
    %v212 = vld [vmem:[#allocation5 + $0x1d0] sm:$0xf]
    %v213 = vld [vmem:[#allocation5 + $0x1d4] sm:$0xf]
    %v214 = vld [vmem:[#allocation5 + $0x1d8] sm:$0xf]
    %v215 = vld [vmem:[#allocation5 + $0x1dc] sm:$0xf]
    %v216 = vld [vmem:[#allocation5 + $0x1e0] sm:$0xf]
    %v217 = vld [vmem:[#allocation5 + $0x1e4] sm:$0xf]
    %v218 = vld [vmem:[#allocation5 + $0x1e8] sm:$0xf]
    %v219 = vld [vmem:[#allocation5 + $0x1ec] sm:$0xf]
    %v220 = vld [vmem:[#allocation5 + $0x1f0] sm:$0xf]
    %v221 = vld [vmem:[#allocation5 + $0x1f4] sm:$0xf]
    %v222 = vld [vmem:[#allocation5 + $0x1f8] sm:$0xf]
    %v223 = vld [vmem:[#allocation5 + $0x1fc] sm:$0xf]
    %v224 = vld [vmem:[%s2] sm:$0x1]
    %v226 = vlaneseq
    %v227 = vshrl.u32 %v226, 7
    %v228 = vsub.s32 0, %v227
    %v229 = vrot.slane %v224, %v228
    %v359 = vunpack.c.l.b16 %v96
    %v360 = vunpack.c.l.b16 %v97
    %v361 = vunpack.c.l.b16 %v98
    %v362 = vunpack.c.l.b16 %v99
    %v363 = vunpack.c.l.b16 %v100
    %v364 = vunpack.c.l.b16 %v101
    %v365 = vunpack.c.l.b16 %v102
    %v366 = vunpack.c.l.b16 %v103
    %v367 = vunpack.c.l.b16 %v104
    %v368 = vunpack.c.l.b16 %v105
    %v369 = vunpack.c.l.b16 %v106
    %v370 = vunpack.c.l.b16 %v107
    %v371 = vunpack.c.l.b16 %v108
    %v372 = vunpack.c.l.b16 %v109
    %v373 = vunpack.c.l.b16 %v110
    %v374 = vunpack.c.l.b16 %v111
    %v375 = vunpack.c.l.b16 %v112
    %v376 = vunpack.c.l.b16 %v113
    %v377 = vunpack.c.l.b16 %v114
    %v378 = vunpack.c.l.b16 %v115
    %v379 = vunpack.c.l.b16 %v116
    %v380 = vunpack.c.l.b16 %v117
    %v381 = vunpack.c.l.b16 %v118
    %v382 = vunpack.c.l.b16 %v119
    %v383 = vunpack.c.l.b16 %v120
    %v384 = vunpack.c.l.b16 %v121
    %v385 = vunpack.c.l.b16 %v122
    %v386 = vunpack.c.l.b16 %v123
    %v387 = vunpack.c.l.b16 %v124
    %v388 = vunpack.c.l.b16 %v125
    %v389 = vunpack.c.l.b16 %v126
    %v390 = vunpack.c.l.b16 %v127
    %v391 = vunpack.c.l.b16 %v128
    %v392 = vunpack.c.l.b16 %v129
    %v393 = vunpack.c.l.b16 %v130
    %v394 = vunpack.c.l.b16 %v131
    %v395 = vunpack.c.l.b16 %v132
    %v396 = vunpack.c.l.b16 %v133
    %v397 = vunpack.c.l.b16 %v134
    %v398 = vunpack.c.l.b16 %v135
    %v399 = vunpack.c.l.b16 %v136
    %v400 = vunpack.c.l.b16 %v137
    %v401 = vunpack.c.l.b16 %v138
    %v402 = vunpack.c.l.b16 %v139
    %v403 = vunpack.c.l.b16 %v140
    %v404 = vunpack.c.l.b16 %v141
    %v405 = vunpack.c.l.b16 %v142
    %v406 = vunpack.c.l.b16 %v143
    %v407 = vunpack.c.l.b16 %v144
    %v408 = vunpack.c.l.b16 %v145
    %v409 = vunpack.c.l.b16 %v146
    %v410 = vunpack.c.l.b16 %v147
    %v411 = vunpack.c.l.b16 %v148
    %v412 = vunpack.c.l.b16 %v149
    %v413 = vunpack.c.l.b16 %v150
    %v414 = vunpack.c.l.b16 %v151
    %v415 = vunpack.c.l.b16 %v152
    %v416 = vunpack.c.l.b16 %v153
    %v417 = vunpack.c.l.b16 %v154
    %v418 = vunpack.c.l.b16 %v155
    %v419 = vunpack.c.l.b16 %v156
    %v420 = vunpack.c.l.b16 %v157
    %v421 = vunpack.c.l.b16 %v158
    %v422 = vunpack.c.l.b16 %v159
    %v423 = vunpack.c.l.b16 %v160
    %v424 = vunpack.c.l.b16 %v161
    %v425 = vunpack.c.l.b16 %v162
    %v426 = vunpack.c.l.b16 %v163
    %v427 = vunpack.c.l.b16 %v164
    %v428 = vunpack.c.l.b16 %v165
    %v429 = vunpack.c.l.b16 %v166
    %v430 = vunpack.c.l.b16 %v167
    %v431 = vunpack.c.l.b16 %v168
    %v432 = vunpack.c.l.b16 %v169
    %v433 = vunpack.c.l.b16 %v170
    %v434 = vunpack.c.l.b16 %v171
    %v435 = vunpack.c.l.b16 %v172
    %v436 = vunpack.c.l.b16 %v173
    %v437 = vunpack.c.l.b16 %v174
    %v438 = vunpack.c.l.b16 %v175
    %v439 = vunpack.c.l.b16 %v176
    %v440 = vunpack.c.l.b16 %v177
    %v441 = vunpack.c.l.b16 %v178
    %v442 = vunpack.c.l.b16 %v179
    %v443 = vunpack.c.l.b16 %v180
    %v444 = vunpack.c.l.b16 %v181
    %v445 = vunpack.c.l.b16 %v182
    %v446 = vunpack.c.l.b16 %v183
    %v447 = vunpack.c.l.b16 %v184
    %v448 = vunpack.c.l.b16 %v185
    %v449 = vunpack.c.l.b16 %v186
    %v450 = vunpack.c.l.b16 %v187
    %v451 = vunpack.c.l.b16 %v188
    %v452 = vunpack.c.l.b16 %v189
    %v453 = vunpack.c.l.b16 %v190
    %v454 = vunpack.c.l.b16 %v191
    %v455 = vunpack.c.l.b16 %v192
    %v456 = vunpack.c.l.b16 %v193
    %v457 = vunpack.c.l.b16 %v194
    %v458 = vunpack.c.l.b16 %v195
    %v459 = vunpack.c.l.b16 %v196
    %v460 = vunpack.c.l.b16 %v197
    %v461 = vunpack.c.l.b16 %v198
    %v462 = vunpack.c.l.b16 %v199
    %v463 = vunpack.c.l.b16 %v200
    %v464 = vunpack.c.l.b16 %v201
    %v465 = vunpack.c.l.b16 %v202
    %v466 = vunpack.c.l.b16 %v203
    %v467 = vunpack.c.l.b16 %v204
    %v468 = vunpack.c.l.b16 %v205
    %v469 = vunpack.c.l.b16 %v206
    %v470 = vunpack.c.l.b16 %v207
    %v471 = vunpack.c.l.b16 %v208
    %v472 = vunpack.c.l.b16 %v209
    %v473 = vunpack.c.l.b16 %v210
    %v474 = vunpack.c.l.b16 %v211
    %v475 = vunpack.c.l.b16 %v212
    %v476 = vunpack.c.l.b16 %v213
    %v477 = vunpack.c.l.b16 %v214
    %v478 = vunpack.c.l.b16 %v215
    %v479 = vunpack.c.l.b16 %v216
    %v480 = vunpack.c.l.b16 %v217
    %v481 = vunpack.c.l.b16 %v218
    %v482 = vunpack.c.l.b16 %v219
    %v483 = vunpack.c.l.b16 %v220
    %v484 = vunpack.c.l.b16 %v221
    %v485 = vunpack.c.l.b16 %v222
    %v486 = vunpack.c.l.b16 %v223
    %v487 = vpack.c.b16 %v360, %v359
    %v488 = vpack.c.b16 %v362, %v361
    %v489 = vpack.c.b16 %v364, %v363
    %v490 = vpack.c.b16 %v366, %v365
    %v491 = vpack.c.b16 %v368, %v367
    %v492 = vpack.c.b16 %v370, %v369
    %v493 = vpack.c.b16 %v372, %v371
    %v494 = vpack.c.b16 %v374, %v373
    %v495 = vpack.c.b16 %v376, %v375
    %v496 = vpack.c.b16 %v378, %v377
    %v497 = vpack.c.b16 %v380, %v379
    %v498 = vpack.c.b16 %v382, %v381
    %v499 = vpack.c.b16 %v384, %v383
    %v500 = vpack.c.b16 %v386, %v385
    %v501 = vpack.c.b16 %v388, %v387
    %v502 = vpack.c.b16 %v390, %v389
    %v503 = vpack.c.b16 %v392, %v391
    %v504 = vpack.c.b16 %v394, %v393
    %v505 = vpack.c.b16 %v396, %v395
    %v506 = vpack.c.b16 %v398, %v397
    %v507 = vpack.c.b16 %v400, %v399
    %v508 = vpack.c.b16 %v402, %v401
    %v509 = vpack.c.b16 %v404, %v403
    %v510 = vpack.c.b16 %v406, %v405
    %v511 = vpack.c.b16 %v408, %v407
    %v512 = vpack.c.b16 %v410, %v409
    %v513 = vpack.c.b16 %v412, %v411
    %v514 = vpack.c.b16 %v414, %v413
    %v515 = vpack.c.b16 %v416, %v415
    %v516 = vpack.c.b16 %v418, %v417
    %v517 = vpack.c.b16 %v420, %v419
    %v518 = vpack.c.b16 %v422, %v421
    %v519 = vpack.c.b16 %v424, %v423
    %v520 = vpack.c.b16 %v426, %v425
    %v521 = vpack.c.b16 %v428, %v427
    %v522 = vpack.c.b16 %v430, %v429
    %v523 = vpack.c.b16 %v432, %v431
    %v524 = vpack.c.b16 %v434, %v433
    %v525 = vpack.c.b16 %v436, %v435
    %v526 = vpack.c.b16 %v438, %v437
    %v527 = vpack.c.b16 %v440, %v439
    %v528 = vpack.c.b16 %v442, %v441
    %v529 = vpack.c.b16 %v444, %v443
    %v530 = vpack.c.b16 %v446, %v445
    %v531 = vpack.c.b16 %v448, %v447
    %v532 = vpack.c.b16 %v450, %v449
    %v533 = vpack.c.b16 %v452, %v451
    %v534 = vpack.c.b16 %v454, %v453
    %v535 = vpack.c.b16 %v456, %v455
    %v536 = vpack.c.b16 %v458, %v457
    %v537 = vpack.c.b16 %v460, %v459
    %v538 = vpack.c.b16 %v462, %v461
    %v539 = vpack.c.b16 %v464, %v463
    %v540 = vpack.c.b16 %v466, %v465
    %v541 = vpack.c.b16 %v468, %v467
    %v542 = vpack.c.b16 %v470, %v469
    %v543 = vpack.c.b16 %v472, %v471
    %v544 = vpack.c.b16 %v474, %v473
    %v545 = vpack.c.b16 %v476, %v475
    %v546 = vpack.c.b16 %v478, %v477
    %v547 = vpack.c.b16 %v480, %v479
    %v548 = vpack.c.b16 %v482, %v481
    %v549 = vpack.c.b16 %v484, %v483
    %v550 = vpack.c.b16 %v486, %v485
    %615 = vmatprep.subr.bf16.mxu0 0
    %616 = vmatpush1.bf16.msra.mxu0 %v494
    %617 = vmatprep.subr.bf16.mxu0 0
    %618 = vmatpush1.bf16.msra.mxu0 %v493
    %619 = vmatprep.subr.bf16.mxu0 0
    %620 = vmatpush1.bf16.msra.mxu0 %v492
    %621 = vmatprep.subr.bf16.mxu0 0
    %622 = vmatpush1.bf16.msra.mxu0 %v491
    %623 = vmatprep.subr.bf16.mxu0 0
    %624 = vmatpush1.bf16.msra.mxu0 %v490
    %625 = vmatprep.subr.bf16.mxu0 0
    %626 = vmatpush1.bf16.msra.mxu0 %v489
    %627 = vmatprep.subr.bf16.mxu0 0
    %628 = vmatpush1.bf16.msra.mxu0 %v488
    %629 = vmatprep.subr.bf16.mxu0 0
    %630 = vmatpush1.bf16.msra.mxu0 %v487
    %631 = vmatprep.subr.bf16.mxu0 0
    %632 = vmatpush2.bf16.msra.mxu0 %v502
    %633 = vmatprep.subr.bf16.mxu0 0
    %634 = vmatpush2.bf16.msra.mxu0 %v501
    %635 = vmatprep.subr.bf16.mxu0 0
    %636 = vmatpush2.bf16.msra.mxu0 %v500
    %637 = vmatprep.subr.bf16.mxu0 0
    %638 = vmatpush2.bf16.msra.mxu0 %v499
    %639 = vmatprep.subr.bf16.mxu0 0
    %640 = vmatpush2.bf16.msra.mxu0 %v498
    %641 = vmatprep.subr.bf16.mxu0 0
    %642 = vmatpush2.bf16.msra.mxu0 %v497
    %643 = vmatprep.subr.bf16.mxu0 0
    %644 = vmatpush2.bf16.msra.mxu0 %v496
    %645 = vmatprep.subr.bf16.mxu0 0
    %646 = vmatpush2.bf16.msra.mxu0 %v495
    %647 = vmatprep.mubr.bf16.mxu0 %v89
    %648 = vmatmul.mubr.bf16.gmra.mxu0 %v88
    %v649 = vpop.f32.mrf.mxu0
    %v650 = vadd.f32 %v229, %v649
    %v651 = vpop.f32.mrf.mxu0
    %v652 = vpop.f32.mrf.mxu0
    %v653 = vpop.f32.mrf.mxu0
    %654 = vdwg.mxu0
    %655 = vmatprep.subr.bf16.mxu0 0
    %656 = vmatpush1.bf16.msra.mxu0 %v510
    %657 = vmatprep.subr.bf16.mxu0 0
    %658 = vmatpush1.bf16.msra.mxu0 %v509
    %659 = vmatprep.subr.bf16.mxu0 0
    %660 = vmatpush1.bf16.msra.mxu0 %v508
    %661 = vmatprep.subr.bf16.mxu0 0
    %662 = vmatpush1.bf16.msra.mxu0 %v507
    %663 = vmatprep.subr.bf16.mxu0 0
    %664 = vmatpush1.bf16.msra.mxu0 %v506
    %665 = vmatprep.subr.bf16.mxu0 0
    %666 = vmatpush1.bf16.msra.mxu0 %v505
    %667 = vmatprep.subr.bf16.mxu0 0
    %668 = vmatpush1.bf16.msra.mxu0 %v504
    %669 = vmatprep.subr.bf16.mxu0 0
    %670 = vmatpush1.bf16.msra.mxu0 %v503
    %671 = vmatprep.subr.bf16.mxu0 0
    %672 = vmatpush2.bf16.msra.mxu0 %v518
    %673 = vmatprep.subr.bf16.mxu0 0
    %674 = vmatpush2.bf16.msra.mxu0 %v517
    %675 = vmatprep.subr.bf16.mxu0 0
    %676 = vmatpush2.bf16.msra.mxu0 %v516
    %677 = vmatprep.subr.bf16.mxu0 0
    %678 = vmatpush2.bf16.msra.mxu0 %v515
    %679 = vmatprep.subr.bf16.mxu0 0
    %680 = vmatpush2.bf16.msra.mxu0 %v514
    %681 = vmatprep.subr.bf16.mxu0 0
    %682 = vmatpush2.bf16.msra.mxu0 %v513
    %683 = vmatprep.subr.bf16.mxu0 0
    %684 = vmatpush2.bf16.msra.mxu0 %v512
    %685 = vmatprep.subr.bf16.mxu0 0
    %686 = vmatpush2.bf16.msra.mxu0 %v511
    %687 = vmatprep.mubr.bf16.mxu0 %v91
    %688 = vmatmul.mubr.bf16.gmra.mxu0 %v90
    %v689 = vpop.f32.mrf.mxu0
    %v690 = vadd.f32 %v650, %v689
    %v691 = vpop.f32.mrf.mxu0
    %v692 = vpop.f32.mrf.mxu0
    %v693 = vpop.f32.mrf.mxu0
    %694 = vdwg.mxu0
    %695 = vmatprep.subr.bf16.mxu0 0
    %696 = vmatpush1.bf16.msra.mxu0 %v526
    %697 = vmatprep.subr.bf16.mxu0 0
    %698 = vmatpush1.bf16.msra.mxu0 %v525
    %699 = vmatprep.subr.bf16.mxu0 0
    %700 = vmatpush1.bf16.msra.mxu0 %v524
    %701 = vmatprep.subr.bf16.mxu0 0
    %702 = vmatpush1.bf16.msra.mxu0 %v523
    %703 = vmatprep.subr.bf16.mxu0 0
    %704 = vmatpush1.bf16.msra.mxu0 %v522
    %705 = vmatprep.subr.bf16.mxu0 0
    %706 = vmatpush1.bf16.msra.mxu0 %v521
    %707 = vmatprep.subr.bf16.mxu0 0
    %708 = vmatpush1.bf16.msra.mxu0 %v520
    %709 = vmatprep.subr.bf16.mxu0 0
    %710 = vmatpush1.bf16.msra.mxu0 %v519
    %711 = vmatprep.subr.bf16.mxu0 0
    %712 = vmatpush2.bf16.msra.mxu0 %v534
    %713 = vmatprep.subr.bf16.mxu0 0
    %714 = vmatpush2.bf16.msra.mxu0 %v533
    %715 = vmatprep.subr.bf16.mxu0 0
    %716 = vmatpush2.bf16.msra.mxu0 %v532
    %717 = vmatprep.subr.bf16.mxu0 0
    %718 = vmatpush2.bf16.msra.mxu0 %v531
    %719 = vmatprep.subr.bf16.mxu0 0
    %720 = vmatpush2.bf16.msra.mxu0 %v530
    %721 = vmatprep.subr.bf16.mxu0 0
    %722 = vmatpush2.bf16.msra.mxu0 %v529
    %723 = vmatprep.subr.bf16.mxu0 0
    %724 = vmatpush2.bf16.msra.mxu0 %v528
    %725 = vmatprep.subr.bf16.mxu0 0
    %726 = vmatpush2.bf16.msra.mxu0 %v527
    %727 = vmatprep.mubr.bf16.mxu0 %v93
    %728 = vmatmul.mubr.bf16.gmra.mxu0 %v92
    %v729 = vpop.f32.mrf.mxu0
    %v730 = vadd.f32 %v690, %v729
    %v731 = vpop.f32.mrf.mxu0
    %v732 = vpop.f32.mrf.mxu0
    %v733 = vpop.f32.mrf.mxu0
    %734 = vdwg.mxu0
    %735 = vmatprep.subr.bf16.mxu0 0
    %736 = vmatpush1.bf16.msra.mxu0 %v542
    %737 = vmatprep.subr.bf16.mxu0 0
    %738 = vmatpush1.bf16.msra.mxu0 %v541
    %739 = vmatprep.subr.bf16.mxu0 0
    %740 = vmatpush1.bf16.msra.mxu0 %v540
    %741 = vmatprep.subr.bf16.mxu0 0
    %742 = vmatpush1.bf16.msra.mxu0 %v539
    %743 = vmatprep.subr.bf16.mxu0 0
    %744 = vmatpush1.bf16.msra.mxu0 %v538
    %745 = vmatprep.subr.bf16.mxu0 0
    %746 = vmatpush1.bf16.msra.mxu0 %v537
    %747 = vmatprep.subr.bf16.mxu0 0
    %748 = vmatpush1.bf16.msra.mxu0 %v536
    %749 = vmatprep.subr.bf16.mxu0 0
    %750 = vmatpush1.bf16.msra.mxu0 %v535
    %751 = vmatprep.subr.bf16.mxu0 0
    %752 = vmatpush2.bf16.msra.mxu0 %v550
    %753 = vmatprep.subr.bf16.mxu0 0
    %754 = vmatpush2.bf16.msra.mxu0 %v549
    %755 = vmatprep.subr.bf16.mxu0 0
    %756 = vmatpush2.bf16.msra.mxu0 %v548
    %757 = vmatprep.subr.bf16.mxu0 0
    %758 = vmatpush2.bf16.msra.mxu0 %v547
    %759 = vmatprep.subr.bf16.mxu0 0
    %760 = vmatpush2.bf16.msra.mxu0 %v546
    %761 = vmatprep.subr.bf16.mxu0 0
    %762 = vmatpush2.bf16.msra.mxu0 %v545
    %763 = vmatprep.subr.bf16.mxu0 0
    %764 = vmatpush2.bf16.msra.mxu0 %v544
    %765 = vmatprep.subr.bf16.mxu0 0
    %766 = vmatpush2.bf16.msra.mxu0 %v543
    %767 = vmatprep.mubr.bf16.mxu0 %v95
    %768 = vmatmul.mubr.bf16.gmra.mxu0 %v94
    %v769 = vpop.f32.mrf.mxu0
    %v770 = vadd.f32 %v730, %v769
    %v771 = vpop.f32.mrf.mxu0
    %v772 = vpop.f32.mrf.mxu0
    %v773 = vpop.f32.mrf.mxu0
    %774 = vdwg.mxu0
    %775 = vst [vmem:[#allocation7] sm:$0x3] %v770
    // Predicated region
    $region22: #{tpu_custom_call.1} parent=1 // pred_check
      _
    $region23: #{tpu_custom_call.1} parent=1 // pred_check_branch
      %777 = sbr.rel (0) target = $region25
    $region24: #{tpu_custom_call.1} parent=1 // pred_region
      %s779 = ssub.s32 32, 32
      %780 = vsyncadd [#allocation4], %s779
      %s782 = sshll.u32 [#allocation7], 4
      %s783 = int_to_ptr.vmem [resolvable:$true] %s782
      %785 = dma.vmem_to_hbm [thread:$0]  %s783, 32, %s3, [#allocation4]
    $region25: #{tpu_custom_call.1} parent=1 // pred_fallthru
      _
    // Predicated region
    $region26: #{tpu_custom_call.1} parent=1 // pred_check
      _
    $region27: #{tpu_custom_call.1} parent=1 // pred_check_branch
      %787 = sbr.rel (0) target = $region29
    $region28: #{tpu_custom_call.1} parent=1 // pred_region
      %788 = dma.done [#allocation4], 32
    $region29: #{tpu_custom_call.1} parent=1 // pred_fallthru
      _
    %789 = vsyncpa [#allocation3], 1
    %790 = vsyncpa [#allocation6], 1
    %791 = vsyncpa [#allocation4], 1

</llo_original>
